<compile_context>
chip_gen: v7x
topology: tpu7x:2x2x1
jax: 0.10.0
libtpu: 0.0.40
codegen_flags: <defaults>
</compile_context>

<pallas_src>
import jax
import jax.numpy as jnp
from jax.experimental import pallas as pl
from jax.experimental.pallas import tpu as pltpu

_SUBLANE = 8


def _round_up(n, m):
    return ((n + m - 1) // m) * m


def _pick_batch_tile(batch, block_batch):
    """Batch tile: multiple of 8 sublanes, capped by block_batch, and (when the
    batch is big enough) chosen so the grid has >= 2 steps for v7x megacore."""
    if batch <= _SUBLANE:
        return batch                       # single block == full array dim (legal)
    tb = min(block_batch, _round_up(batch, _SUBLANE))
    if pl.cdiv(batch, tb) < 2:             # give both v7x TensorCores a tile
        tb = _round_up(pl.cdiv(batch, 2), _SUBLANE)
    return tb


# --------------------------------------------------------------------------- #
# Kernel: one MXU matmul (f32 accumulate) + broadcast bias add, direct store.
# --------------------------------------------------------------------------- #
def _fused_linear_kernel(x_ref, w_ref, b_ref, o_ref):
    acc = jnp.dot(x_ref[...], w_ref[...], preferred_element_type=jnp.float32)
    o_ref[...] = (acc + b_ref[...]).astype(o_ref.dtype)


# --------------------------------------------------------------------------- #
# Parameter fusion (run once, outside the per-call path).
# --------------------------------------------------------------------------- #
def fuse_params(params):
    """Fold the 3 linear layers into a single (W, b) pair, in f32."""
    w1, b1 = params["w1"], params["b1"]
    w2, b2 = params["w2"], params["b2"]
    w3, b3 = params["w3"], params["b3"]
    w = ((w1 @ w2) @ w3).astype(jnp.float32)                  # (in_dim, out_dim)
    b = ((b1 @ w2) @ w3 + b2 @ w3 + b3).astype(jnp.float32)   # (1, out_dim)
    return {"w": w, "b": b}


# --------------------------------------------------------------------------- #
# Forward
# --------------------------------------------------------------------------- #
def mymodel_forward(x, fused, *, block_batch=1024, min_pallas_batch=1024,
                    force_pallas=False):
    """Forward pass of MyModel using the pre-fused (W, b).

    x:     (batch, input_dim)
    fused: dict from fuse_params() with "w" (in_dim, out_dim), "b" (1, out_dim)
    """
    w, b = fused["w"], fused["b"]
    in_dim, out_dim = w.shape
    batch = x.shape[0]
    in_dtype = x.dtype

    # Small-batch dispatch: pallas_call fixed overhead dwarfs a tiny matmul.
    if not force_pallas and batch < min_pallas_batch:
        return (jnp.dot(x.astype(jnp.float32), w,
                        preferred_element_type=jnp.float32) + b).astype(in_dtype)

    x_f32 = x.astype(jnp.float32)          # no-op for f32 inputs (the usual case)

    tb = _pick_batch_tile(batch, block_batch)
    grid = (pl.cdiv(batch, tb),)

    out = pl.pallas_call(
        _fused_linear_kernel,
        out_shape=jax.ShapeDtypeStruct((batch, out_dim), jnp.float32),
        grid_spec=pltpu.PrefetchScalarGridSpec(
            num_scalar_prefetch=0,
            grid=grid,
            in_specs=[
                # x tile strides over the batch axis (ragged final block OK).
                pl.BlockSpec((tb, in_dim), lambda i: (i, 0)),
                # fused weight + bias stay VMEM-resident (constant block index).
                pl.BlockSpec((in_dim, out_dim), lambda i: (0, 0)),
                pl.BlockSpec((1, out_dim), lambda i: (0, 0)),
            ],
            # Un-padded output block: last dim == full array dim (legal); the
            # HBM writeback carries only useful bytes.
            out_specs=pl.BlockSpec((tb, out_dim), lambda i: (i, 0)),
        ),
        compiler_params=pltpu.CompilerParams(
            dimension_semantics=("parallel",),
        ),
    )(x_f32, w, b)

    return out.astype(in_dtype)


# --------------------------------------------------------------------------- #
# Reference + init
# --------------------------------------------------------------------------- #
def init_params(key, input_dim, hidden_1, hidden_2, output_dim):
    """Deterministic synthetic initialization (uniform, PyTorch-Linear-like scale)."""
    keys = jax.random.split(key, 6)

    def _uniform(k, shape, fan_in):
        bound = 1.0 / jnp.sqrt(jnp.float32(fan_in))
        return jax.random.uniform(k, shape, jnp.float32, -bound, bound)

    return {
        "w1": _uniform(keys[0], (input_dim, hidden_1), input_dim),
        "b1": _uniform(keys[1], (1, hidden_1), input_dim),
        "w2": _uniform(keys[2], (hidden_1, hidden_2), hidden_1),
        "b2": _uniform(keys[3], (1, hidden_2), hidden_1),
        "w3": _uniform(keys[4], (hidden_2, output_dim), hidden_2),
        "b3": _uniform(keys[5], (1, output_dim), hidden_2),
    }


def _reference(x, p):
    return ((x @ p["w1"] + p["b1"]) @ p["w2"] + p["b2"]) @ p["w3"] + p["b3"]


if __name__ == "__main__":
    # Shapes consistent with the module's forward:
    # batch=8, input_dim=32, hidden_layer_1=64, hidden_layer_2=32, output_dim=2
    batch, input_dim, h1, h2, out_dim = 8, 32, 64, 32, 2

    key = jax.random.PRNGKey(0)
    k_x, k_p, k_x2 = jax.random.split(key, 3)

    params = init_params(k_p, input_dim, h1, h2, out_dim)
    fused = fuse_params(params)            # hoisted out of the per-call path

    # --- small-batch check (single grid step, Pallas path forced) -----------
    x = jax.random.normal(k_x, (batch, input_dim), dtype=jnp.float32)
    y = jax.block_until_ready(mymodel_forward(x, fused, force_pallas=True))
    y_ref = _reference(x, params)
    assert y.shape == (batch, out_dim)
    assert jnp.allclose(y, y_ref, atol=1e-4, rtol=1e-4)

    # --- multi-step grid check (ragged final batch block, no padding copy) --
    batch2 = 300
    x2 = jax.random.normal(k_x2, (batch2, input_dim), dtype=jnp.float32)
    y2 = jax.block_until_ready(
        mymodel_forward(x2, fused, block_batch=128, force_pallas=True))
    y2_ref = _reference(x2, params)
    assert y2.shape == (batch2, out_dim)
    assert jnp.allclose(y2, y2_ref, atol=1e-4, rtol=1e-4)

    # --- small-batch fast path (plain jnp dispatch) sanity check -------------
    y3 = jax.block_until_ready(mymodel_forward(x, fused))
    assert jnp.allclose(y3, y_ref, atol=1e-4, rtol=1e-4)

    print("KERNEL_OK")
</pallas_src>

<mosaic_0001>
module attributes {stable_mosaic.version = 11 : i64} {
  func.func @_fused_linear_kernel(%arg0: i32, %arg1: memref<8x32xf32, #tpu.memory_space<vmem>>, %arg2: memref<32x2xf32, #tpu.memory_space<vmem>>, %arg3: memref<1x2xf32, #tpu.memory_space<vmem>>, %arg4: memref<8x2xf32, #tpu.memory_space<vmem>>) attributes {dimension_semantics = [#tpu.dimension_semantics<parallel>], iteration_bounds = array<i64: 1>, scalar_prefetch = 0 : i64, scratch_operands = 0 : i64, tpu.core_type = #tpu.core_type<tc>, window_params = [{transform_indices = @transform_0, window_bounds = array<i64: 8, 32>}, {pipeline_mode = #tpu.pipeline_mode<synchronous>, transform_indices = @transform_1, window_bounds = array<i64: 32, 2>}, {pipeline_mode = #tpu.pipeline_mode<synchronous>, transform_indices = @transform_2, window_bounds = array<i64: 1, 2>}, {transform_indices = @transform_3, window_bounds = array<i64: 8, 2>}]} {
    %c0 = arith.constant 0 : index
    %c0_0 = arith.constant 0 : index
    %0 = vector.load %arg1[%c0, %c0_0] : memref<8x32xf32, #tpu.memory_space<vmem>>, vector<8x32xf32>
    %c0_1 = arith.constant 0 : index
    %c0_2 = arith.constant 0 : index
    %1 = vector.load %arg2[%c0_1, %c0_2] : memref<32x2xf32, #tpu.memory_space<vmem>>, vector<32x2xf32>
    %cst = arith.constant dense<0.000000e+00> : vector<8x2xf32>
    %2 = tpu.matmul %0, %1, %cst {dimension_numbers = #tpu.dot_dimension_numbers<[1], [0], [0], [1], [0, 0, 1, 1], [], []>} : vector<8x32xf32>, vector<32x2xf32>, vector<8x2xf32> -> vector<8x2xf32>
    %c0_3 = arith.constant 0 : index
    %c0_4 = arith.constant 0 : index
    %3 = vector.load %arg3[%c0_3, %c0_4] : memref<1x2xf32, #tpu.memory_space<vmem>>, vector<1x2xf32>
    %4 = vector.broadcast %3 : vector<1x2xf32> to vector<8x2xf32>
    %5 = arith.addf %2, %4 : vector<8x2xf32>
    %c0_5 = arith.constant 0 : index
    %c0_6 = arith.constant 0 : index
    %6 = vector.load %arg4[%c0_5, %c0_6] : memref<8x2xf32, #tpu.memory_space<vmem>>, vector<8x2xf32>
    tpu.vector_store %arg4[%c0_5, %c0_6], %5 {strides = array<i32>} : memref<8x2xf32, #tpu.memory_space<vmem>>, vector<8x2xf32>,
    return
  }
  func.func @transform_0(%arg0: i32) -> (i32, i32) {
    %c0_i32 = arith.constant 0 : i32
    %c0_i32_0 = arith.constant 0 : i32
    return %arg0, %c0_i32 : i32, i32
  }
  func.func @transform_1(%arg0: i32) -> (i32, i32) {
    %c0_i32 = arith.constant 0 : i32
    %c0_i32_0 = arith.constant 0 : i32
    %c0_i32_1 = arith.constant 0 : i32
    return %c0_i32, %c0_i32_0 : i32, i32
  }
  func.func @transform_2(%arg0: i32) -> (i32, i32) {
    %c0_i32 = arith.constant 0 : i32
    %c0_i32_0 = arith.constant 0 : i32
    %c0_i32_1 = arith.constant 0 : i32
    return %c0_i32, %c0_i32_0 : i32, i32
  }
  func.func @transform_3(%arg0: i32) -> (i32, i32) {
    %c0_i32 = arith.constant 0 : i32
    %c0_i32_0 = arith.constant 0 : i32
    return %arg0, %c0_i32 : i32, i32
  }
}

</mosaic_0001>

<llo_original>
// kernel: tpu_custom_call.1
$region0: #{tpu_custom_call.1}
  #allocation0 [shape = 'u32[]', space=smem, size = 0x4, offset = 0x4, fixed_abs, tag = 'smem constant byte address 0x4 - core index']
  #allocation1 [shape = 'u32[144,128]{1,0:T(1,128)}', space=vmem, size = 0x12000, scoped, tag = 'internal scratch']
  %s0 = inlined_call_operand.vmem [shape: f32[8,32], index: 0, kind: input, shape index: {}]
  %s1 = inlined_call_operand.vmem [shape: f32[32,2], index: 1, kind: input, shape index: {}]
  %s2 = inlined_call_operand.vmem [shape: f32[1,2], index: 2, kind: input, shape index: {}]
  %s3 = inlined_call_operand.vmem [shape: f32[8,2], index: 3, kind: output, shape index: {}]
  %s4 = sld [smem:[#allocation0]]
  $region22: #{tpu_custom_call.1} parent=0
    _
  %s6 = ssub.s32 1, %s4
  %s7 = scalar_select 0, %s6, %s4
  // Predicated region
  $region2: #{tpu_custom_call.1} parent=0 // pred_check
    _
  $region3: #{tpu_custom_call.1} parent=0 // pred_check_branch
    %9 = sbr.rel (0) target = $region5
  $region4: #{tpu_custom_call.1} parent=0 // pred_region
    _
  $region5: #{tpu_custom_call.1} parent=0 // pred_fallthru
    _
  // Predicated region
  $region6: #{tpu_custom_call.1} parent=0 // pred_check
    _
  $region7: #{tpu_custom_call.1} parent=0 // pred_check_branch
    %11 = sbr.rel (0) target = $region9
  $region8: #{tpu_custom_call.1} parent=0 // pred_region
    _
  $region9: #{tpu_custom_call.1} parent=0 // pred_fallthru
    _
  // Predicated region
  $region10: #{tpu_custom_call.1} parent=0 // pred_check
    _
  $region11: #{tpu_custom_call.1} parent=0 // pred_check_branch
    %13 = sbr.rel (0) target = $region13
  $region12: #{tpu_custom_call.1} parent=0 // pred_region
    _
  $region13: #{tpu_custom_call.1} parent=0 // pred_fallthru
    _
  %v14 = vld [vmem:[%s0] sm:$0xff]
  %v15 = vld [vmem:[%s1] sm:$0xff]
  %v16 = vld [vmem:[%s1 + $0x8] sm:$0xff]
  %v17 = vld [vmem:[%s1 + $0x10] sm:$0xff]
  %v18 = vld [vmem:[%s1 + $0x18] sm:$0xff]
  %v19 = vld [vmem:[%s2] sm:$0x1]
  %v21 = vlaneseq
  %v22 = vshrl.u32 %v21, 7
  %v23 = vsub.s32 0, %v22
  %v24 = vrot.slane %v19, %v23
  %vm26 = vcmask 261120
  %v28 = vsel %vm26, %v14, 0
  %30 = vmatprep.subr.mxu0 0.0
  %31 = vmatpush1.msra.mxu0 %v15
  %32 = vmatprep.subr.mxu0 0.0
  %33 = vmatpush1.msra.mxu0 %v16
  %34 = vmatprep.subr.mxu0 0.0
  %35 = vmatpush1.msra.mxu0 %v17
  %36 = vmatprep.subr.mxu0 0.0
  %37 = vmatpush1.msra.mxu0 %v18
  %38 = vmatprep.subr.mxu0 0.0
  %39 = vmatpush1.msra.mxu0 0.0
  %40 = vmatprep.subr.mxu0 0.0
  %41 = vmatpush1.msra.mxu0 0.0
  %42 = vmatprep.subr.mxu0 0.0
  %43 = vmatpush1.msra.mxu0 0.0
  %44 = vmatprep.subr.mxu0 0.0
  %45 = vmatpush1.msra.mxu0 0.0
  %46 = vmatprep.subr.mxu0 0.0
  %47 = vmatpush1.msra.mxu0 0.0
  %48 = vmatprep.subr.mxu0 0.0
  %49 = vmatpush1.msra.mxu0 0.0
  %50 = vmatprep.subr.mxu0 0.0
  %51 = vmatpush1.msra.mxu0 0.0
  %52 = vmatprep.subr.mxu0 0.0
  %53 = vmatpush1.msra.mxu0 0.0
  %54 = vmatprep.subr.mxu0 0.0
  %55 = vmatpush1.msra.mxu0 0.0
  %56 = vmatprep.subr.mxu0 0.0
  %57 = vmatpush1.msra.mxu0 0.0
  %58 = vmatprep.subr.mxu0 0.0
  %59 = vmatpush1.msra.mxu0 0.0
  %60 = vmatprep.subr.mxu0 0.0
  %61 = vmatpush1.msra.mxu0 0.0
  %62 = vmatprep.subr.mxu0 0.0
  %63 = vmatpush1.msra.mxu0 0.0
  %64 = vmatprep.subr.mxu0 0.0
  %65 = vmatpush1.msra.mxu0 0.0
  %66 = vmatprep.subr.mxu0 0.0
  %67 = vmatpush1.msra.mxu0 0.0
  %68 = vmatprep.subr.mxu0 0.0
  %69 = vmatpush1.msra.mxu0 0.0
  %70 = vmatprep.subr.mxu0 0.0
  %71 = vmatpush1.msra.mxu0 0.0
  %72 = vmatprep.subr.mxu0 0.0
  %73 = vmatpush1.msra.mxu0 0.0
  %74 = vmatprep.subr.mxu0 0.0
  %75 = vmatpush1.msra.mxu0 0.0
  %76 = vmatprep.subr.mxu0 0.0
  %77 = vmatpush1.msra.mxu0 0.0
  %78 = vmatprep.subr.mxu0 0.0
  %79 = vmatpush1.msra.mxu0 0.0
  %80 = vmatprep.subr.mxu0 0.0
  %81 = vmatpush1.msra.mxu0 0.0
  %82 = vmatprep.subr.mxu0 0.0
  %83 = vmatpush1.msra.mxu0 0.0
  %84 = vmatprep.subr.mxu0 0.0
  %85 = vmatpush1.msra.mxu0 0.0
  %86 = vmatprep.subr.mxu0 0.0
  %87 = vmatpush1.msra.mxu0 0.0
  %88 = vmatprep.subr.mxu0 0.0
  %89 = vmatpush1.msra.mxu0 0.0
  %90 = vmatprep.subr.mxu0 0.0
  %91 = vmatpush1.msra.mxu0 0.0
  %92 = vmatprep.subr.mxu0 0.0
  %93 = vmatpush1.msra.mxu0 0.0
  %94 = vmatprep.mubr.f32.mxu0 0.0
  %95 = vmatmul.mubr.f32.gmra.mrb[0].mxu0 %v28
  %v96 = vpop.f32.mrb[0].mxu0
  %v97 = vadd.f32 %v24, %v96
  %v98 = vpop.f32.mrb[0].mxu0
  %99 = vdwg.mxu0
  %vm100 = vcmask 15360
  %101 = vst.msk [vmem:[%s3] sm:$0xff] %vm100, %v97
  // Predicated region
  $region14: #{tpu_custom_call.1} parent=0 // pred_check
    _
  $region15: #{tpu_custom_call.1} parent=0 // pred_check_branch
    %103 = sbr.rel (0) target = $region17
  $region16: #{tpu_custom_call.1} parent=0 // pred_region
    _
  $region17: #{tpu_custom_call.1} parent=0 // pred_fallthru
    _
  // Predicated region
  $region18: #{tpu_custom_call.1} parent=0 // pred_check
    _
  $region19: #{tpu_custom_call.1} parent=0 // pred_check_branch
    %105 = sbr.rel (0) target = $region21
  $region20: #{tpu_custom_call.1} parent=0 // pred_region
    _
  $region21: #{tpu_custom_call.1} parent=0 // pred_fallthru
    _

</llo_original>
